<compile_context>
chip_gen: v5e
topology: v5e:2x2
jax: 0.10.0
libtpu: 0.0.40
codegen_flags: <defaults>
</compile_context>

<pallas_src>
import functools

import jax
import jax.numpy as jnp
from jax.experimental import pallas as pl
from jax.experimental.pallas import tpu as pltpu

_LANE = 128


def _linear_kernel(x_ref, w_ref, b_ref, o_ref):
    # x_ref: (tm, D)      streaming row tile of the flattened input (input dtype)
    # w_ref: (D, C_pad)   full padded, pre-transposed weight — VMEM-resident
    # b_ref: (1, C_pad)   bias (f32) — VMEM-resident
    # o_ref: (tm, C_pad)  lane-dense output tile
    acc = jnp.dot(x_ref[...], w_ref[...], preferred_element_type=jnp.float32)
    o_ref[...] = (acc + b_ref[...]).astype(o_ref.dtype)


@functools.partial(jax.jit, static_argnames=("block_rows", "out_dtype", "unpad"))
def logistic_regression_forward(x_nchw, weight, bias, *, block_rows=1024,
                                out_dtype=None, unpad=True):
    """x_nchw: (B, 1, 28, 28); weight: (C, 784); bias: (C,) -> (B, C) logits.

    The compute/storage dtype follows x's dtype (pass bf16 x for a halved-HBM
    path); logits are returned in `out_dtype` (default: same dtype as x).
    """
    B = x_nchw.shape[0]
    C, D = weight.shape

    # Glue: flatten(input, 1). No dtype cast, no batch padding -> no extra
    # HBM round-trips of x outside the kernel.
    x2d = x_nchw.reshape(B, D)
    cdt = x2d.dtype
    odt = cdt if out_dtype is None else jnp.dtype(out_dtype)

    # Lane-dense class padding: C -> multiple of 128 (keep the minimum; the
    # kernel is memory-bound, widening N only adds output writeback).
    C_pad = max(_LANE, ((C + _LANE - 1) // _LANE) * _LANE)
    # One-time ~0.4 MB transform: zero-pad classes and pre-transpose to (D, C_pad).
    w_pad = jnp.zeros((C_pad, D), dtype=cdt).at[:C, :].set(weight.astype(cdt)).T
    b_pad = jnp.zeros((1, C_pad), dtype=jnp.float32).at[0, :C].set(
        bias.astype(jnp.float32))

    # Batch-aware row tile (multiple of 8): at least 2 grid steps whenever
    # B > 8, capped at block_rows.
    tm = min(block_rows, ((pl.cdiv(B, 2) + 7) // 8) * 8)
    grid = (pl.cdiv(B, tm),)   # ragged last tile: OOB output rows masked on store

    x_item = jnp.dtype(cdt).itemsize
    o_item = jnp.dtype(odt).itemsize
    cost = pl.CostEstimate(
        flops=2 * B * D * C_pad,
        transcendentals=0,
        bytes_accessed=(B * D * x_item + C_pad * D * x_item
                        + C_pad * 4 + B * C_pad * o_item),
    )

    out = pl.pallas_call(
        _linear_kernel,
        out_shape=jax.ShapeDtypeStruct((B, C_pad), odt),
        grid_spec=pltpu.PrefetchScalarGridSpec(
            num_scalar_prefetch=0,
            grid=grid,
            in_specs=[
                pl.BlockSpec((tm, D), lambda i: (i, 0)),       # x: streams over batch
                pl.BlockSpec((D, C_pad), lambda i: (0, 0)),    # W: VMEM-resident
                pl.BlockSpec((1, C_pad), lambda i: (0, 0)),    # bias: VMEM-resident
            ],
            out_specs=pl.BlockSpec((tm, C_pad), lambda i: (i, 0)),
        ),
        compiler_params=pltpu.CompilerParams(
            dimension_semantics=("parallel",),   # v7x: shard batch tiles across 2 TCs
        ),
        cost_estimate=cost,
    )(x2d, w_pad, b_pad)

    if unpad:
        return out[:, :C]
    return out   # lane-dense (B, C_pad) slab; classes >= C are exactly bias-free zeros


if __name__ == "__main__":
    num_classes = 10
    in_features = 28 * 28
    batch = 12   # not a multiple of the 8-row tile -> exercises the ragged last tile

    key = jax.random.PRNGKey(0)
    kx, kw, kb = jax.random.split(key, 3)

    # Deterministic params mimicking nn.Linear default init:
    # U(-1/sqrt(fan_in), 1/sqrt(fan_in)) for both weight and bias.
    bound = 1.0 / jnp.sqrt(jnp.float32(in_features))
    weight = jax.random.uniform(kw, (num_classes, in_features),
                                minval=-bound, maxval=bound, dtype=jnp.float32)
    bias = jax.random.uniform(kb, (num_classes,),
                              minval=-bound, maxval=bound, dtype=jnp.float32)

    # Example input, NCHW like PyTorch MNIST: (B, 1, 28, 28)
    x = jax.random.normal(kx, (batch, 1, 28, 28), dtype=jnp.float32)
    ref = x.reshape(batch, -1) @ weight.T + bias

    # f32 path: tight check against plain-JAX reference.
    y = jax.block_until_ready(logistic_regression_forward(x, weight, bias))
    assert y.shape == (batch, num_classes)
    assert y.dtype == jnp.float32
    assert jnp.allclose(y, ref, atol=1e-5, rtol=1e-5)

    # bf16 storage path: caller stores x in bf16 -> halved input traffic;
    # f32 accumulation, bf16 logits (looser tolerance for bf16 rounding).
    y_bf16 = jax.block_until_ready(
        logistic_regression_forward(x.astype(jnp.bfloat16), weight, bias))
    assert y_bf16.shape == (batch, num_classes)
    assert y_bf16.dtype == jnp.bfloat16
    assert jnp.allclose(y_bf16.astype(jnp.float32), ref, atol=1e-1, rtol=1e-1)

    # Padded lane-dense output variant (downstream softmax can ignore cols >= C).
    y_pad = jax.block_until_ready(
        logistic_regression_forward(x, weight, bias, unpad=False))
    assert y_pad.shape == (batch, 128)
    assert jnp.allclose(y_pad[:, :num_classes], ref, atol=1e-5, rtol=1e-5)

    print("KERNEL_OK")
</pallas_src>

<mosaic_0001>
module attributes {stable_mosaic.version = 11 : i64} {
  func.func @_linear_kernel(%arg0: i32, %arg1: memref<8x784xf32, #tpu.memory_space<vmem>>, %arg2: memref<784x128xf32, #tpu.memory_space<vmem>>, %arg3: memref<1x128xf32, #tpu.memory_space<vmem>>, %arg4: memref<8x128xf32, #tpu.memory_space<vmem>>) attributes {dimension_semantics = [#tpu.dimension_semantics<parallel>], iteration_bounds = array<i64: 2>, scalar_prefetch = 0 : i64, scratch_operands = 0 : i64, tpu.core_type = #tpu.core_type<tc>, window_params = [{transform_indices = @transform_0, window_bounds = array<i64: 8, 784>}, {pipeline_mode = #tpu.pipeline_mode<synchronous>, transform_indices = @transform_1, window_bounds = array<i64: 784, 128>}, {pipeline_mode = #tpu.pipeline_mode<synchronous>, transform_indices = @transform_2, window_bounds = array<i64: 1, 128>}, {transform_indices = @transform_3, window_bounds = array<i64: 8, 128>}]} {
    %c0 = arith.constant 0 : index
    %c0_0 = arith.constant 0 : index
    %0 = vector.load %arg1[%c0, %c0_0] : memref<8x784xf32, #tpu.memory_space<vmem>>, vector<8x784xf32>
    %c0_1 = arith.constant 0 : index
    %c0_2 = arith.constant 0 : index
    %1 = vector.load %arg2[%c0_1, %c0_2] : memref<784x128xf32, #tpu.memory_space<vmem>>, vector<784x128xf32>
    %cst = arith.constant dense<0.000000e+00> : vector<8x128xf32>
    %2 = tpu.matmul %0, %1, %cst {dimension_numbers = #tpu.dot_dimension_numbers<[1], [0], [0], [1], [0, 0, 1, 1], [], []>} : vector<8x784xf32>, vector<784x128xf32>, vector<8x128xf32> -> vector<8x128xf32>
    %c0_3 = arith.constant 0 : index
    %c0_4 = arith.constant 0 : index
    %3 = vector.load %arg3[%c0_3, %c0_4] : memref<1x128xf32, #tpu.memory_space<vmem>>, vector<1x128xf32>
    %4 = vector.broadcast %3 : vector<1x128xf32> to vector<8x128xf32>
    %5 = arith.addf %2, %4 : vector<8x128xf32>
    %c0_5 = arith.constant 0 : index
    %c0_6 = arith.constant 0 : index
    %6 = vector.load %arg4[%c0_5, %c0_6] : memref<8x128xf32, #tpu.memory_space<vmem>>, vector<8x128xf32>
    tpu.vector_store %arg4[%c0_5, %c0_6], %5 {strides = array<i32>} : memref<8x128xf32, #tpu.memory_space<vmem>>, vector<8x128xf32>,
    return
  }
  func.func @transform_0(%arg0: i32) -> (i32, i32) {
    %c0_i32 = arith.constant 0 : i32
    %c0_i32_0 = arith.constant 0 : i32
    return %arg0, %c0_i32 : i32, i32
  }
  func.func @transform_1(%arg0: i32) -> (i32, i32) {
    %c0_i32 = arith.constant 0 : i32
    %c0_i32_0 = arith.constant 0 : i32
    %c0_i32_1 = arith.constant 0 : i32
    return %c0_i32, %c0_i32_0 : i32, i32
  }
  func.func @transform_2(%arg0: i32) -> (i32, i32) {
    %c0_i32 = arith.constant 0 : i32
    %c0_i32_0 = arith.constant 0 : i32
    %c0_i32_1 = arith.constant 0 : i32
    return %c0_i32, %c0_i32_0 : i32, i32
  }
  func.func @transform_3(%arg0: i32) -> (i32, i32) {
    %c0_i32 = arith.constant 0 : i32
    %c0_i32_0 = arith.constant 0 : i32
    return %arg0, %c0_i32 : i32, i32
  }
}

</mosaic_0001>

<llo_original>
// kernel: logistic_regression_forward.1
$region0: #{logistic_regression_forward.1}
  #allocation0 [shape = 'u32[]', space=smem, size = 0x4, offset = 0x4, fixed_abs, tag = 'smem constant byte address 0x4 - core index']
  #allocation1 [shape = 'u32[72,128]{1,0:T(1,128)}', space=vmem, size = 0x9000, scoped, tag = 'internal scratch']
  %s0 = inlined_call_operand.vmem [shape: f32[12,784], index: 0, kind: input, shape index: {}]
  %s1 = inlined_call_operand.vmem [shape: f32[784,128], index: 1, kind: input, shape index: {}]
  %s2 = inlined_call_operand.vmem [shape: f32[1,128], index: 2, kind: input, shape index: {}]
  %s3 = inlined_call_operand.hbm [shape: f32[12,128], index: 3, kind: output, shape index: {}]
  %s4 = sld [smem:[#allocation0]]
  $region45: #{logistic_regression_forward.1} parent=0
    _
  %s6 = ssub.s32 1, %s4
  %s7 = scalar_select 0, %s6, %s4
  $region1: #{logistic_regression_forward.1} parent=0
    #allocation2 [shape = 'u8[8192]{0}', space=vmem, size = 0x2000, scoped, tag = 'output window, operand 0']
    #allocation3 [shape = 's32[2]{0}', space=sflag, size = 0x8, scoped, tag = 'scoped memory for logistic_regression_forward.1']
    %8 = vsyncpa [#allocation3], 0
    %s9 = scalar_lea.sflag [#allocation3], 1
    %10 = vsyncpa %s9, 0
    loop: start=0, step=1, limit=4
    $region2: #{logistic_regression_forward.1} parent=1 // loop_pre_header
      _
    $region3: #{logistic_regression_forward.1} parent=1 // loop_header
      %s12 = sphi 0, %s16
      %p13 = scmp.ge.s32.totalorder %s12, 4
      %s22 = sphi 0, %s24
      %s25 = sphi 0, %s22
      %s26 = sphi 0, %s25
      %s42 = sphi 0, %s26
      %s46 = sphi 0, %s46
      %s48 = sphi 0, %s46
      %s49 = sphi 0, %s48
      %s63 = sphi 0, %s49
      %s67 = sphi 0, %s67
      %s69 = sphi 0, %s67
      %s70 = sphi 0, %s69
      %s84 = sphi 0, %s70
      %s90 = sphi 0, %s92
      %s93 = sphi 0, %s90
      %s94 = sphi 0, %s93
      %s110 = sphi 0, %s94
    $region4: #{logistic_regression_forward.1} parent=1 // loop_header_branch
      %15 = sbr.rel (%p13) target = $region8
    $region5: #{logistic_regression_forward.1} parent=1 // loop_body
      %s17 = ssub.s32 %s12, 1
      %s18 = ssub.s32 %s12, 2
      %s19 = sadd.s32 %s12, 1
      %s20 = ssub.s32 %s12, %s19
      %p21 = scmp.eq.s32.totalorder %s20, 0
      %s23 = sadd.s32 %s22, 1
      %s24 = scalar_select %p21, %s22, %s23
      %p27 = pneg %p21
      %p28 = scmp.eq.s32.totalorder %s12, 1
      %p29 = por %p27, %p28
      %p30 = scmp.ne.s32.totalorder %s22, %s25
      %p31 = scmp.eq.s32.totalorder %s12, 0
      %p32 = por %p30, %p31
      %p33 = scmp.ne.s32.totalorder %s22, %s25
      %p34 = scmp.eq.s32.totalorder %s17, 1
      %p35 = por %p33, %p34
      %p36 = scmp.ne.s32.totalorder %s25, %s26
      %p37 = scmp.eq.s32.totalorder %s17, 0
      %p38 = por %p36, %p37
      %p39 = scmp.ne.s32.totalorder %s25, %s26
      %p40 = scmp.eq.s32.totalorder %s18, 1
      %p41 = por %p39, %p40
      %p43 = scmp.ne.s32.totalorder %s26, %s42
      %p44 = scmp.eq.s32.totalorder %s18, 0
      %p45 = por %p43, %p44
      %s47 = sadd.s32 %s46, 1
      %p50 = scmp.eq.s32.totalorder %s12, 1
      %p51 = scmp.ne.s32.totalorder %s46, %s48
      %p52 = scmp.eq.s32.totalorder %s12, 0
      %p53 = por %p51, %p52
      %p54 = scmp.ne.s32.totalorder %s46, %s48
      %p55 = scmp.eq.s32.totalorder %s17, 1
      %p56 = por %p54, %p55
      %p57 = scmp.ne.s32.totalorder %s48, %s49
      %p58 = scmp.eq.s32.totalorder %s17, 0
      %p59 = por %p57, %p58
      %p60 = scmp.ne.s32.totalorder %s48, %s49
      %p61 = scmp.eq.s32.totalorder %s18, 1
      %p62 = por %p60, %p61
      %p64 = scmp.ne.s32.totalorder %s49, %s63
      %p65 = scmp.eq.s32.totalorder %s18, 0
      %p66 = por %p64, %p65
      %s68 = sadd.s32 %s67, 1
      %p71 = scmp.eq.s32.totalorder %s12, 1
      %p72 = scmp.ne.s32.totalorder %s67, %s69
      %p73 = scmp.eq.s32.totalorder %s12, 0
      %p74 = por %p72, %p73
      %p75 = scmp.ne.s32.totalorder %s67, %s69
      %p76 = scmp.eq.s32.totalorder %s17, 1
      %p77 = por %p75, %p76
      %p78 = scmp.ne.s32.totalorder %s69, %s70
      %p79 = scmp.eq.s32.totalorder %s17, 0
      %p80 = por %p78, %p79
      %p81 = scmp.ne.s32.totalorder %s69, %s70
      %p82 = scmp.eq.s32.totalorder %s18, 1
      %p83 = por %p81, %p82
      %p85 = scmp.ne.s32.totalorder %s70, %s84
      %p86 = scmp.eq.s32.totalorder %s18, 0
      %p87 = por %p85, %p86
      %s88 = ssub.s32 %s12, %s19
      %p89 = scmp.eq.s32.totalorder %s88, 0
      %s91 = sadd.s32 %s90, 1
      %s92 = scalar_select %p89, %s90, %s91
      %p95 = pneg %p89
      %p96 = scmp.eq.s32.totalorder %s12, 1
      %p97 = por %p95, %p96
      %p98 = scmp.ne.s32.totalorder %s90, %s93
      %p99 = scmp.eq.s32.totalorder %s12, 0
      %p100 = por %p98, %p99
      %p101 = scmp.ne.s32.totalorder %s90, %s93
      %p102 = scmp.eq.s32.totalorder %s17, 1
      %p103 = por %p101, %p102
      %p104 = scmp.ne.s32.totalorder %s93, %s94
      %p105 = scmp.eq.s32.totalorder %s17, 0
      %p106 = por %p104, %p105
      %p107 = scmp.ne.s32.totalorder %s93, %s94
      %p108 = scmp.eq.s32.totalorder %s18, 1
      %p109 = por %p107, %p108
      %p111 = scmp.ne.s32.totalorder %s94, %s110
      %p112 = scmp.eq.s32.totalorder %s18, 0
      %p113 = por %p111, %p112
      %p114 = scmp.le.s32.totalorder 1, %s12
      %p115 = scmp.lt.s32.totalorder %s12, 3
      %p116 = pnand %p114, %p115
      %p117 = pneg %p116
      // Predicated region
      $region9: #{logistic_regression_forward.1} parent=5 // pred_check
        _
      $region10: #{logistic_regression_forward.1} parent=5 // pred_check_branch
        %119 = sbr.rel (%p116) target = $region12
      $region11: #{logistic_regression_forward.1} parent=5 // pred_region
        %s120 = ssub.s32 %s12, 1
        // Predicated region
        $region13: #{logistic_regression_forward.1} parent=11 // pred_check
          %p121 = pneg %p59
        $region14: #{logistic_regression_forward.1} parent=11 // pred_check_branch
          %123 = sbr.rel (%p121) target = $region16
        $region15: #{logistic_regression_forward.1} parent=11 // pred_region
          _
        $region16: #{logistic_regression_forward.1} parent=11 // pred_fallthru
          _
        // Predicated region
        $region17: #{logistic_regression_forward.1} parent=11 // pred_check
          %p124 = pneg %p80
        $region18: #{logistic_regression_forward.1} parent=11 // pred_check_branch
          %126 = sbr.rel (%p124) target = $region20
        $region19: #{logistic_regression_forward.1} parent=11 // pred_region
          _
        $region20: #{logistic_regression_forward.1} parent=11 // pred_fallthru
          _
      $region12: #{logistic_regression_forward.1} parent=5 // pred_fallthru
        _
      %p127 = scmp.lt.s32.totalorder %s12, 2
      // Predicated region
      $region21: #{logistic_regression_forward.1} parent=5 // pred_check
        %p128 = pneg %p127
      $region22: #{logistic_regression_forward.1} parent=5 // pred_check_branch
        %130 = sbr.rel (%p128) target = $region24
      $region23: #{logistic_regression_forward.1} parent=5 // pred_region
        // Predicated region
        $region25: #{logistic_regression_forward.1} parent=23 // pred_check
          %p131 = pneg %p32
        $region26: #{logistic_regression_forward.1} parent=23 // pred_check_branch
          %133 = sbr.rel (%p131) target = $region28
        $region27: #{logistic_regression_forward.1} parent=23 // pred_region
          %p134 = scmp.lt.s32.totalorder %s12, 1
          %s135 = scalar_select %p134, %s12, 1
          %s136 = smul.addr %s135, 7
          %s137 = smul.addr %s136, 8
          %s138 = scalar_lea.vmem %s0, %s137
        $region28: #{logistic_regression_forward.1} parent=23 // pred_fallthru
          _
      $region24: #{logistic_regression_forward.1} parent=5 // pred_fallthru
        _
      %p139 = scmp.le.s32.totalorder 1, %s12
      %p140 = scmp.lt.s32.totalorder %s12, 3
      %p141 = pnand %p139, %p140
      %p142 = pneg %p141
      // Predicated region
      $region29: #{logistic_regression_forward.1} parent=5 // pred_check
        _
      $region30: #{logistic_regression_forward.1} parent=5 // pred_check_branch
        %144 = sbr.rel (%p141) target = $region32
      $region31: #{logistic_regression_forward.1} parent=5 // pred_region
        %s145 = ssub.s32 %s12, 1
        %p146 = scmp.lt.s32.totalorder %s17, 1
        %s147 = scalar_select %p146, %s17, 1
        %s148 = smul.addr %s147, 7
        %s149 = smul.addr %s148, 8
        %s150 = scalar_lea.vmem %s0, %s149
        %p151 = pneg %p38
        %p152 = pneg %p35
        %p153 = pneg %p59
        %p154 = pneg %p56
        %p155 = pneg %p80
        %p156 = pneg %p77
        %p157 = pneg %p106
        %p158 = pneg %p103
        %s159 = sand.u32 %s93, 1
        %s160 = scalar_lea.sflag [#allocation3], %s159
        %s161 = sand.u32 %s93, 1
        %s162 = smul.addr %s161, 8
        %s163 = scalar_lea.vmem [#allocation2], %s162
        %p164 = scmp.lt.s32.totalorder %s17, 1
        %s165 = scalar_select %p164, %s17, 1
        %s166 = smul.addr %s165, 7
        %s167 = smul.addr %s166, 8
        %s168 = scalar_lea.vmem %s0, %s167
        %v169 = vld [vmem:[%s168] sm:$0xff]
        %v170 = vld [vmem:[%s168 + $0x8] sm:$0xff]
        %v171 = vld [vmem:[%s168 + $0x10] sm:$0xff]
        %v172 = vld [vmem:[%s168 + $0x18] sm:$0xff]
        %v173 = vld [vmem:[%s168 + $0x20] sm:$0xff]
        %v174 = vld [vmem:[%s168 + $0x28] sm:$0xff]
        %v175 = vld [vmem:[%s168 + $0x30] sm:$0xff]
        %v176 = vld [vmem:[%s1] sm:$0xff]
        %v177 = vld [vmem:[%s1 + $0x8] sm:$0xff]
        %v178 = vld [vmem:[%s1 + $0x10] sm:$0xff]
        %v179 = vld [vmem:[%s1 + $0x18] sm:$0xff]
        %v180 = vld [vmem:[%s1 + $0x20] sm:$0xff]
        %v181 = vld [vmem:[%s1 + $0x28] sm:$0xff]
        %v182 = vld [vmem:[%s1 + $0x30] sm:$0xff]
        %v183 = vld [vmem:[%s1 + $0x38] sm:$0xff]
        %v184 = vld [vmem:[%s1 + $0x40] sm:$0xff]
        %v185 = vld [vmem:[%s1 + $0x48] sm:$0xff]
        %v186 = vld [vmem:[%s1 + $0x50] sm:$0xff]
        %v187 = vld [vmem:[%s1 + $0x58] sm:$0xff]
        %v188 = vld [vmem:[%s1 + $0x60] sm:$0xff]
        %v189 = vld [vmem:[%s1 + $0x68] sm:$0xff]
        %v190 = vld [vmem:[%s1 + $0x70] sm:$0xff]
        %v191 = vld [vmem:[%s1 + $0x78] sm:$0xff]
        %v192 = vld [vmem:[%s1 + $0x80] sm:$0xff]
        %v193 = vld [vmem:[%s1 + $0x88] sm:$0xff]
        %v194 = vld [vmem:[%s1 + $0x90] sm:$0xff]
        %v195 = vld [vmem:[%s1 + $0x98] sm:$0xff]
        %v196 = vld [vmem:[%s1 + $0xa0] sm:$0xff]
        %v197 = vld [vmem:[%s1 + $0xa8] sm:$0xff]
        %v198 = vld [vmem:[%s1 + $0xb0] sm:$0xff]
        %v199 = vld [vmem:[%s1 + $0xb8] sm:$0xff]
        %v200 = vld [vmem:[%s1 + $0xc0] sm:$0xff]
        %v201 = vld [vmem:[%s1 + $0xc8] sm:$0xff]
        %v202 = vld [vmem:[%s1 + $0xd0] sm:$0xff]
        %v203 = vld [vmem:[%s1 + $0xd8] sm:$0xff]
        %v204 = vld [vmem:[%s1 + $0xe0] sm:$0xff]
        %v205 = vld [vmem:[%s1 + $0xe8] sm:$0xff]
        %v206 = vld [vmem:[%s1 + $0xf0] sm:$0xff]
        %v207 = vld [vmem:[%s1 + $0xf8] sm:$0xff]
        %v208 = vld [vmem:[%s1 + $0x100] sm:$0xff]
        %v209 = vld [vmem:[%s1 + $0x108] sm:$0xff]
        %v210 = vld [vmem:[%s1 + $0x110] sm:$0xff]
        %v211 = vld [vmem:[%s1 + $0x118] sm:$0xff]
        %v212 = vld [vmem:[%s1 + $0x120] sm:$0xff]
        %v213 = vld [vmem:[%s1 + $0x128] sm:$0xff]
        %v214 = vld [vmem:[%s1 + $0x130] sm:$0xff]
        %v215 = vld [vmem:[%s1 + $0x138] sm:$0xff]
        %v216 = vld [vmem:[%s1 + $0x140] sm:$0xff]
        %v217 = vld [vmem:[%s1 + $0x148] sm:$0xff]
        %v218 = vld [vmem:[%s1 + $0x150] sm:$0xff]
        %v219 = vld [vmem:[%s1 + $0x158] sm:$0xff]
        %v220 = vld [vmem:[%s1 + $0x160] sm:$0xff]
        %v221 = vld [vmem:[%s1 + $0x168] sm:$0xff]
        %v222 = vld [vmem:[%s1 + $0x170] sm:$0xff]
        %v223 = vld [vmem:[%s1 + $0x178] sm:$0xff]
        %v224 = vld [vmem:[%s1 + $0x180] sm:$0xff]
        %v225 = vld [vmem:[%s1 + $0x188] sm:$0xff]
        %v226 = vld [vmem:[%s1 + $0x190] sm:$0xff]
        %v227 = vld [vmem:[%s1 + $0x198] sm:$0xff]
        %v228 = vld [vmem:[%s1 + $0x1a0] sm:$0xff]
        %v229 = vld [vmem:[%s1 + $0x1a8] sm:$0xff]
        %v230 = vld [vmem:[%s1 + $0x1b0] sm:$0xff]
        %v231 = vld [vmem:[%s1 + $0x1b8] sm:$0xff]
        %v232 = vld [vmem:[%s1 + $0x1c0] sm:$0xff]
        %v233 = vld [vmem:[%s1 + $0x1c8] sm:$0xff]
        %v234 = vld [vmem:[%s1 + $0x1d0] sm:$0xff]
        %v235 = vld [vmem:[%s1 + $0x1d8] sm:$0xff]
        %v236 = vld [vmem:[%s1 + $0x1e0] sm:$0xff]
        %v237 = vld [vmem:[%s1 + $0x1e8] sm:$0xff]
        %v238 = vld [vmem:[%s1 + $0x1f0] sm:$0xff]
        %v239 = vld [vmem:[%s1 + $0x1f8] sm:$0xff]
        %v240 = vld [vmem:[%s1 + $0x200] sm:$0xff]
        %v241 = vld [vmem:[%s1 + $0x208] sm:$0xff]
        %v242 = vld [vmem:[%s1 + $0x210] sm:$0xff]
        %v243 = vld [vmem:[%s1 + $0x218] sm:$0xff]
        %v244 = vld [vmem:[%s1 + $0x220] sm:$0xff]
        %v245 = vld [vmem:[%s1 + $0x228] sm:$0xff]
        %v246 = vld [vmem:[%s1 + $0x230] sm:$0xff]
        %v247 = vld [vmem:[%s1 + $0x238] sm:$0xff]
        %v248 = vld [vmem:[%s1 + $0x240] sm:$0xff]
        %v249 = vld [vmem:[%s1 + $0x248] sm:$0xff]
        %v250 = vld [vmem:[%s1 + $0x250] sm:$0xff]
        %v251 = vld [vmem:[%s1 + $0x258] sm:$0xff]
        %v252 = vld [vmem:[%s1 + $0x260] sm:$0xff]
        %v253 = vld [vmem:[%s1 + $0x268] sm:$0xff]
        %v254 = vld [vmem:[%s1 + $0x270] sm:$0xff]
        %v255 = vld [vmem:[%s1 + $0x278] sm:$0xff]
        %v256 = vld [vmem:[%s1 + $0x280] sm:$0xff]
        %v257 = vld [vmem:[%s1 + $0x288] sm:$0xff]
        %v258 = vld [vmem:[%s1 + $0x290] sm:$0xff]
        %v259 = vld [vmem:[%s1 + $0x298] sm:$0xff]
        %v260 = vld [vmem:[%s1 + $0x2a0] sm:$0xff]
        %v261 = vld [vmem:[%s1 + $0x2a8] sm:$0xff]
        %v262 = vld [vmem:[%s1 + $0x2b0] sm:$0xff]
        %v263 = vld [vmem:[%s1 + $0x2b8] sm:$0xff]
        %v264 = vld [vmem:[%s1 + $0x2c0] sm:$0xff]
        %v265 = vld [vmem:[%s1 + $0x2c8] sm:$0xff]
        %v266 = vld [vmem:[%s1 + $0x2d0] sm:$0xff]
        %v267 = vld [vmem:[%s1 + $0x2d8] sm:$0xff]
        %v268 = vld [vmem:[%s1 + $0x2e0] sm:$0xff]
        %v269 = vld [vmem:[%s1 + $0x2e8] sm:$0xff]
        %v270 = vld [vmem:[%s1 + $0x2f0] sm:$0xff]
        %v271 = vld [vmem:[%s1 + $0x2f8] sm:$0xff]
        %v272 = vld [vmem:[%s1 + $0x300] sm:$0xff]
        %v273 = vld [vmem:[%s1 + $0x308] sm:$0xff]
        %v274 = vld [vmem:[%s2] sm:$0x1]
        %v276 = vperm.slane %v274, 0
        %vm278 = vcmask 130048
        %v280 = vsel %vm278, %v175, 0
        %282 = vmatpush.msra.mxu0 %v191
        %283 = vmatpush.msra.mxu0 %v190
        %284 = vmatpush.msra.mxu0 %v189
        %285 = vmatpush.msra.mxu0 %v188
        %286 = vmatpush.msra.mxu0 %v187
        %287 = vmatpush.msra.mxu0 %v186
        %288 = vmatpush.msra.mxu0 %v185
        %289 = vmatpush.msra.mxu0 %v184
        %290 = vmatpush.msra.mxu0 %v183
        %291 = vmatpush.msra.mxu0 %v182
        %292 = vmatpush.msra.mxu0 %v181
        %293 = vmatpush.msra.mxu0 %v180
        %294 = vmatpush.msra.mxu0 %v179
        %295 = vmatpush.msra.mxu0 %v178
        %296 = vmatpush.msra.mxu0 %v177
        %297 = vmatpush.msra.mxu0 %v176
        %298 = vmatmul.f32.gmra.mxu0 %v169
        %v299 = vpop.f32.mrf.mxu0
        %v300 = vadd.f32 %v276, %v299
        %301 = vdwg.mxu0
        %302 = vmatpush.msra.mxu0 %v207
        %303 = vmatpush.msra.mxu0 %v206
        %304 = vmatpush.msra.mxu0 %v205
        %305 = vmatpush.msra.mxu0 %v204
        %306 = vmatpush.msra.mxu0 %v203
        %307 = vmatpush.msra.mxu0 %v202
        %308 = vmatpush.msra.mxu0 %v201
        %309 = vmatpush.msra.mxu0 %v200
        %310 = vmatpush.msra.mxu0 %v199
        %311 = vmatpush.msra.mxu0 %v198
        %312 = vmatpush.msra.mxu0 %v197
        %313 = vmatpush.msra.mxu0 %v196
        %314 = vmatpush.msra.mxu0 %v195
        %315 = vmatpush.msra.mxu0 %v194
        %316 = vmatpush.msra.mxu0 %v193
        %317 = vmatpush.msra.mxu0 %v192
        %318 = vmatmul.f32.gmra.mxu0 %v170
        %v319 = vpop.f32.mrf.mxu0
        %v320 = vadd.f32 %v300, %v319
        %321 = vdwg.mxu0
        %322 = vmatpush.msra.mxu0 %v223
        %323 = vmatpush.msra.mxu0 %v222
        %324 = vmatpush.msra.mxu0 %v221
        %325 = vmatpush.msra.mxu0 %v220
        %326 = vmatpush.msra.mxu0 %v219
        %327 = vmatpush.msra.mxu0 %v218
        %328 = vmatpush.msra.mxu0 %v217
        %329 = vmatpush.msra.mxu0 %v216
        %330 = vmatpush.msra.mxu0 %v215
        %331 = vmatpush.msra.mxu0 %v214
        %332 = vmatpush.msra.mxu0 %v213
        %333 = vmatpush.msra.mxu0 %v212
        %334 = vmatpush.msra.mxu0 %v211
        %335 = vmatpush.msra.mxu0 %v210
        %336 = vmatpush.msra.mxu0 %v209
        %337 = vmatpush.msra.mxu0 %v208
        %338 = vmatmul.f32.gmra.mxu0 %v171
        %v339 = vpop.f32.mrf.mxu0
        %v340 = vadd.f32 %v320, %v339
        %341 = vdwg.mxu0
        %342 = vmatpush.msra.mxu0 %v239
        %343 = vmatpush.msra.mxu0 %v238
        %344 = vmatpush.msra.mxu0 %v237
        %345 = vmatpush.msra.mxu0 %v236
        %346 = vmatpush.msra.mxu0 %v235
        %347 = vmatpush.msra.mxu0 %v234
        %348 = vmatpush.msra.mxu0 %v233
        %349 = vmatpush.msra.mxu0 %v232
        %350 = vmatpush.msra.mxu0 %v231
        %351 = vmatpush.msra.mxu0 %v230
        %352 = vmatpush.msra.mxu0 %v229
        %353 = vmatpush.msra.mxu0 %v228
        %354 = vmatpush.msra.mxu0 %v227
        %355 = vmatpush.msra.mxu0 %v226
        %356 = vmatpush.msra.mxu0 %v225
        %357 = vmatpush.msra.mxu0 %v224
        %358 = vmatmul.f32.gmra.mxu0 %v172
        %v359 = vpop.f32.mrf.mxu0
        %v360 = vadd.f32 %v340, %v359
        %361 = vdwg.mxu0
        %362 = vmatpush.msra.mxu0 %v255
        %363 = vmatpush.msra.mxu0 %v254
        %364 = vmatpush.msra.mxu0 %v253
        %365 = vmatpush.msra.mxu0 %v252
        %366 = vmatpush.msra.mxu0 %v251
        %367 = vmatpush.msra.mxu0 %v250
        %368 = vmatpush.msra.mxu0 %v249
        %369 = vmatpush.msra.mxu0 %v248
        %370 = vmatpush.msra.mxu0 %v247
        %371 = vmatpush.msra.mxu0 %v246
        %372 = vmatpush.msra.mxu0 %v245
        %373 = vmatpush.msra.mxu0 %v244
        %374 = vmatpush.msra.mxu0 %v243
        %375 = vmatpush.msra.mxu0 %v242
        %376 = vmatpush.msra.mxu0 %v241
        %377 = vmatpush.msra.mxu0 %v240
        %378 = vmatmul.f32.gmra.mxu0 %v173
        %v379 = vpop.f32.mrf.mxu0
        %v380 = vadd.f32 %v360, %v379
        %381 = vdwg.mxu0
        %382 = vmatpush.msra.mxu0 %v271
        %383 = vmatpush.msra.mxu0 %v270
        %384 = vmatpush.msra.mxu0 %v269
        %385 = vmatpush.msra.mxu0 %v268
        %386 = vmatpush.msra.mxu0 %v267
        %387 = vmatpush.msra.mxu0 %v266
        %388 = vmatpush.msra.mxu0 %v265
        %389 = vmatpush.msra.mxu0 %v264
        %390 = vmatpush.msra.mxu0 %v263
        %391 = vmatpush.msra.mxu0 %v262
        %392 = vmatpush.msra.mxu0 %v261
        %393 = vmatpush.msra.mxu0 %v260
        %394 = vmatpush.msra.mxu0 %v259
        %395 = vmatpush.msra.mxu0 %v258
        %396 = vmatpush.msra.mxu0 %v257
        %397 = vmatpush.msra.mxu0 %v256
        %398 = vmatmul.f32.gmra.mxu0 %v174
        %v399 = vpop.f32.mrf.mxu0
        %v400 = vadd.f32 %v380, %v399
        %401 = vdwg.mxu0
        %402 = vmatpush.msra.mxu0 0.0
        %403 = vmatpush.msra.mxu0 0.0
        %404 = vmatpush.msra.mxu0 0.0
        %405 = vmatpush.msra.mxu0 0.0
        %406 = vmatpush.msra.mxu0 0.0
        %407 = vmatpush.msra.mxu0 0.0
        %408 = vmatpush.msra.mxu0 0.0
        %409 = vmatpush.msra.mxu0 0.0
        %410 = vmatpush.msra.mxu0 0.0
        %411 = vmatpush.msra.mxu0 0.0
        %412 = vmatpush.msra.mxu0 0.0
        %413 = vmatpush.msra.mxu0 0.0
        %414 = vmatpush.msra.mxu0 0.0
        %415 = vmatpush.msra.mxu0 0.0
        %416 = vmatpush.msra.mxu0 %v273
        %417 = vmatpush.msra.mxu0 %v272
        %418 = vmatmul.f32.gmra.mxu0 %v280
        %v419 = vpop.f32.mrf.mxu0
        %v420 = vadd.f32 %v400, %v419
        %421 = vdwg.mxu0
        %422 = vst [vmem:[%s163] sm:$0xff] %v420
        %s423 = sand.u32 %s93, 1
        %s424 = scalar_lea.sflag [#allocation3], %s423
        %s425 = sand.u32 %s93, 1
        %s426 = smul.addr %s425, 8
        %s427 = scalar_lea.vmem [#allocation2], %s426
        // Predicated region
        $region33: #{logistic_regression_forward.1} parent=31 // pred_check
          %p428 = pneg %p103
        $region34: #{logistic_regression_forward.1} parent=31 // pred_check_branch
          %430 = sbr.rel (%p428) target = $region36
        $region35: #{logistic_regression_forward.1} parent=31 // pred_region
          %432 = vsyncadd %s424, 0
          %s433 = smul.addr %s17, 8
          %s434 = scalar_lea.hbm %s3, %s433
          %s436 = sshll.u32 %s427, 4
          %s437 = int_to_ptr.vmem [resolvable:$true] %s436
          %s438 = sshll.u32 %s434, 4
          %s439 = int_to_ptr.hbm [resolvable:$true] %s438
          %441 = dma.vmem_to_hbm [thread:$0]  %s437, 128, %s439, %s424
        $region36: #{logistic_regression_forward.1} parent=31 // pred_fallthru
          _
      $region32: #{logistic_regression_forward.1} parent=5 // pred_fallthru
        _
      %p442 = scmp.le.s32.totalorder 2, %s12
      // Predicated region
      $region37: #{logistic_regression_forward.1} parent=5 // pred_check
        %p443 = pneg %p442
      $region38: #{logistic_regression_forward.1} parent=5 // pred_check_branch
        %445 = sbr.rel (%p443) target = $region40
      $region39: #{logistic_regression_forward.1} parent=5 // pred_region
        %s446 = ssub.s32 %s12, 2
        // Predicated region
        $region41: #{logistic_regression_forward.1} parent=39 // pred_check
          %p447 = pneg %p109
        $region42: #{logistic_regression_forward.1} parent=39 // pred_check_branch
          %449 = sbr.rel (%p447) target = $region44
        $region43: #{logistic_regression_forward.1} parent=39 // pred_region
          %s450 = sand.u32 %s94, 1
          %s451 = scalar_lea.sflag [#allocation3], %s450
          %s452 = sand.u32 %s94, 1
          %s453 = smul.addr %s452, 8
          %s454 = scalar_lea.vmem [#allocation2], %s453
          %456 = dma.done %s451, 128
        $region44: #{logistic_regression_forward.1} parent=39 // pred_fallthru
          _
      $region40: #{logistic_regression_forward.1} parent=5 // pred_fallthru
        _
    $region6: #{logistic_regression_forward.1} parent=1 // loop_footer
      %s16 = sadd.s32 1, %s12
    $region7: #{logistic_regression_forward.1} parent=1 // loop_footer_branch
      %11 = sbr.rel target = $region3
    $region8: #{logistic_regression_forward.1} parent=1 // loop_exit
      _
    %457 = vsyncpa [#allocation3], 1
    %s458 = scalar_lea.sflag [#allocation3], 1
    %459 = vsyncpa %s458, 1

</llo_original>
